<compile_context>
chip_gen: v6e
topology: v6e:2x2x1
jax: 0.10.0
libtpu: 0.0.40
codegen_flags: <defaults>
</compile_context>

<pallas_src>
import functools
import math

import jax
import jax.numpy as jnp
from jax.experimental import pallas as pl
from jax.experimental.pallas import tpu as pltpu

# ----------------------------- toy config (lane-dense) -----------------------------
BATCH = 2
SEQ = 8
HIDDEN = 128        # multiple of 128 -> lane-dense activations / weights
VOCAB = 512         # multiple of 128 at toy size; wrapper pads arbitrary vocab sizes
LN_EPS = 1e-12

_VMEM_LIMIT = 48 * 1024 * 1024   # > 16/32 MiB scoped defaults, < v7x 64 MiB physical


def _round_up(x, m):
    return ((x + m - 1) // m) * m


# ----------------------------- fused Pallas kernel -----------------------------
def _prediction_head_kernel(x_ref, wd_ref, bd_ref, g_ref, bln_ref,
                            wdec_ref, bdec_ref, o_ref, h_ref, *, eps):
    """Grid step = (row tile i, vocab tile j).

    j == 0 : dense -> exact GELU -> LayerNorm for this row tile, cached in VMEM scratch
             (stored in the MXU compute dtype, cast exactly once).
    every j: decoder matmul of the cached transformed hidden against this vocab tile.
    """
    j = pl.program_id(1)   # vocab-tile axis (innermost, "arbitrary")

    @pl.when(j == 0)
    def _():
        # x / wd are already in the compute dtype (cast outside the kernel).
        h = jnp.dot(x_ref[...], wd_ref[...], preferred_element_type=jnp.float32)
        h = h + bd_ref[...]                                   # f32 bias
        # exact (erf) GELU, matching torch.nn.functional.gelu default
        h = 0.5 * h * (1.0 + jax.lax.erf(h * (1.0 / math.sqrt(2.0))))
        # LayerNorm in f32 on the VPU/EUP
        mu = jnp.mean(h, axis=-1, keepdims=True)
        var = jnp.mean(jnp.square(h - mu), axis=-1, keepdims=True)
        y = (h - mu) * jax.lax.rsqrt(var + eps)
        y = y * g_ref[...] + bln_ref[...]
        h_ref[...] = y.astype(h_ref.dtype)                    # single cast, reused for all j

    # decoder projection for this vocab tile (accumulate in f32 on the MXU)
    out = jnp.dot(h_ref[...], wdec_ref[...], preferred_element_type=jnp.float32)
    out = out + bdec_ref[...]
    o_ref[...] = out.astype(o_ref.dtype)


def prediction_head(hidden_states, params, *, compute_dtype=jnp.float32,
                    out_dtype=None, row_tile=None, vocab_tile=None):
    """hidden_states: (B, S, D). Returns (B, S, V) prediction scores.

    compute_dtype: MXU operand dtype. Use jnp.bfloat16 at real BERT dims for 2x MXU
    throughput and half the decoder-weight / logit HBM traffic.
    """
    B, S, D = hidden_states.shape
    M = B * S
    V = params["dec_w"].shape[1]
    out_dtype = hidden_states.dtype if out_dtype is None else out_dtype

    # Row tile: as large as possible (compute-bound decoder matmul), capped for VMEM.
    tm = (M if M <= 512 else 512) if row_tile is None else row_tile
    assert M % tm == 0 and tm % 8 == 0, (M, tm)

    # Vocab tile: lane-dense (multiple of 128); pad V so the last tile is full.
    tn = min(512, _round_up(V, 128)) if vocab_tile is None else vocab_tile
    assert tn % 128 == 0, tn
    Vp = _round_up(V, tn)

    # Cast MXU operands to the compute dtype OUTSIDE the kernel (HBM-side), so a bf16
    # configuration actually halves the weight DMA stream. Small params stay f32.
    x2d = hidden_states.reshape(M, D).astype(compute_dtype)
    dense_w = params["dense_w"].astype(compute_dtype)
    dense_b = params["dense_b"].reshape(1, D).astype(jnp.float32)
    ln_g = params["ln_g"].reshape(1, D).astype(jnp.float32)
    ln_b = params["ln_b"].reshape(1, D).astype(jnp.float32)
    dec_w = params["dec_w"].astype(compute_dtype)
    dec_b = params["dec_b"].astype(jnp.float32)
    if Vp != V:   # pad vocab dim to a lane-dense multiple of tn; sliced off below
        dec_w = jnp.pad(dec_w, ((0, 0), (0, Vp - V)))
        dec_b = jnp.pad(dec_b, ((0, Vp - V),))
    dec_b = dec_b.reshape(1, Vp)

    out = pl.pallas_call(
        functools.partial(_prediction_head_kernel, eps=LN_EPS),
        out_shape=jax.ShapeDtypeStruct((M, Vp), out_dtype),
        grid=(M // tm, Vp // tn),
        in_specs=[
            pl.BlockSpec((tm, D), lambda i, j: (i, 0)),   # x rows
            pl.BlockSpec((D, D), lambda i, j: (0, 0)),    # dense weight
            pl.BlockSpec((1, D), lambda i, j: (0, 0)),    # dense bias (f32)
            pl.BlockSpec((1, D), lambda i, j: (0, 0)),    # LN gamma  (f32)
            pl.BlockSpec((1, D), lambda i, j: (0, 0)),    # LN beta   (f32)
            pl.BlockSpec((D, tn), lambda i, j: (0, j)),   # decoder weight (vocab-tiled)
            pl.BlockSpec((1, tn), lambda i, j: (0, j)),   # decoder bias   (f32)
        ],
        out_specs=pl.BlockSpec((tm, tn), lambda i, j: (i, j)),
        # Transformed hidden cached in the compute dtype (cast once at j==0).
        scratch_shapes=[pltpu.VMEM((tm, D), compute_dtype)],
        compiler_params=pltpu.CompilerParams(
            # j must stay "arbitrary": scratch is (re)initialized only at j==0.
            dimension_semantics=("parallel", "arbitrary"),
            vmem_limit_bytes=_VMEM_LIMIT),
    )(x2d, dense_w, dense_b, ln_g, ln_b, dec_w, dec_b)

    if Vp != V:
        out = out[:, :V]
    return out.reshape(B, S, V)


# ----------------------------- pure-JAX reference -----------------------------
def prediction_head_ref(hidden_states, params):
    x = hidden_states.astype(jnp.float32)
    h = jnp.dot(x, params["dense_w"],
                precision=jax.lax.Precision.HIGHEST) + params["dense_b"]
    h = 0.5 * h * (1.0 + jax.lax.erf(h * (1.0 / math.sqrt(2.0))))
    mu = jnp.mean(h, axis=-1, keepdims=True)
    var = jnp.mean(jnp.square(h - mu), axis=-1, keepdims=True)
    y = (h - mu) * jax.lax.rsqrt(var + LN_EPS)
    y = y * params["ln_g"] + params["ln_b"]
    return jnp.dot(y, params["dec_w"],
                   precision=jax.lax.Precision.HIGHEST) + params["dec_b"]


# ----------------------------- param init -----------------------------
def init_params(key, hidden=HIDDEN, vocab=VOCAB, scale=0.02):
    k1, k2 = jax.random.split(key)
    return dict(
        dense_w=scale * jax.random.normal(k1, (hidden, hidden), jnp.float32),
        dense_b=jnp.zeros((hidden,), jnp.float32),
        ln_g=jnp.ones((hidden,), jnp.float32),
        ln_b=jnp.zeros((hidden,), jnp.float32),
        dec_w=scale * jax.random.normal(k2, (hidden, vocab), jnp.float32),
        dec_b=jnp.zeros((vocab,), jnp.float32),
    )


# ----------------------------- main -----------------------------
if __name__ == "__main__":
    key = jax.random.PRNGKey(0)
    k_param, k_x = jax.random.split(key)

    params = init_params(k_param, HIDDEN, VOCAB)
    hidden_states = jax.random.normal(k_x, (BATCH, SEQ, HIDDEN), dtype=jnp.float32)
    ref = prediction_head_ref(hidden_states, params)

    # 1) f32 MXU path: matches the PyTorch (f32) reference tightly.
    fwd_f32 = jax.jit(functools.partial(prediction_head, compute_dtype=jnp.float32))
    out_f32 = jax.block_until_ready(fwd_f32(hidden_states, params))
    assert out_f32.shape == (BATCH, SEQ, VOCAB), out_f32.shape
    assert bool(jnp.all(jnp.isfinite(out_f32)))
    assert bool(jnp.allclose(out_f32, ref, rtol=2e-3, atol=2e-3)), (
        float(jnp.max(jnp.abs(out_f32 - ref))))

    # 2) bf16 performance configuration (bf16 weights/activations/logits in HBM,
    #    f32 accumulation + f32 GELU/LN): looser tolerance expected.
    fwd_bf16 = jax.jit(functools.partial(prediction_head, compute_dtype=jnp.bfloat16))
    out_bf16 = jax.block_until_ready(
        fwd_bf16(hidden_states.astype(jnp.bfloat16), params))
    assert out_bf16.dtype == jnp.bfloat16
    assert bool(jnp.allclose(out_bf16.astype(jnp.float32), ref, rtol=5e-2, atol=5e-2)), (
        float(jnp.max(jnp.abs(out_bf16.astype(jnp.float32) - ref))))

    # 3) non-multiple-of-128 vocab exercises the lane-dense padding path
    #    (what real BERT vocab 30522 needs).
    params_odd = init_params(jax.random.PRNGKey(1), HIDDEN, 500)
    ref_odd = prediction_head_ref(hidden_states, params_odd)
    out_odd = jax.block_until_ready(jax.jit(prediction_head)(hidden_states, params_odd))
    assert out_odd.shape == (BATCH, SEQ, 500), out_odd.shape
    assert bool(jnp.allclose(out_odd, ref_odd, rtol=2e-3, atol=2e-3)), (
        float(jnp.max(jnp.abs(out_odd - ref_odd))))

    print("KERNEL_OK")
</pallas_src>

<mosaic_0001>
module attributes {stable_mosaic.version = 11 : i64} {
  func.func @_prediction_head_kernel(%arg0: i32, %arg1: i32, %arg2: memref<16x128xf32, #tpu.memory_space<vmem>>, %arg3: memref<128x128xf32, #tpu.memory_space<vmem>>, %arg4: memref<1x128xf32, #tpu.memory_space<vmem>>, %arg5: memref<1x128xf32, #tpu.memory_space<vmem>>, %arg6: memref<1x128xf32, #tpu.memory_space<vmem>>, %arg7: memref<128x512xf32, #tpu.memory_space<vmem>>, %arg8: memref<1x512xf32, #tpu.memory_space<vmem>>, %arg9: memref<16x512xf32, #tpu.memory_space<vmem>>, %arg10: memref<16x128xf32, #tpu.memory_space<vmem>>) attributes {dimension_semantics = [#tpu.dimension_semantics<parallel>, #tpu.dimension_semantics<arbitrary>], iteration_bounds = array<i64: 1, 1>, scalar_prefetch = 0 : i64, scratch_operands = 1 : i64, tpu.core_type = #tpu.core_type<tc>, window_params = [{transform_indices = @transform_0, window_bounds = array<i64: 16, 128>}, {pipeline_mode = #tpu.pipeline_mode<synchronous>, transform_indices = @transform_1, window_bounds = array<i64: 128, 128>}, {pipeline_mode = #tpu.pipeline_mode<synchronous>, transform_indices = @transform_2, window_bounds = array<i64: 1, 128>}, {pipeline_mode = #tpu.pipeline_mode<synchronous>, transform_indices = @transform_3, window_bounds = array<i64: 1, 128>}, {pipeline_mode = #tpu.pipeline_mode<synchronous>, transform_indices = @transform_4, window_bounds = array<i64: 1, 128>}, {transform_indices = @transform_5, window_bounds = array<i64: 128, 512>}, {transform_indices = @transform_6, window_bounds = array<i64: 1, 512>}, {transform_indices = @transform_7, window_bounds = array<i64: 16, 512>}]} {
    %c0_i32 = arith.constant 0 : i32
    %0 = arith.cmpi eq, %arg1, %c0_i32 : i32
    %1 = arith.extui %0 : i1 to i32
    %c0_i32_0 = arith.constant 0 : i32
    %2 = arith.cmpi ne, %1, %c0_i32_0 : i32
    scf.if %2 {
      %c0_8 = arith.constant 0 : index
      %c0_9 = arith.constant 0 : index
      %10 = vector.load %arg2[%c0_8, %c0_9] : memref<16x128xf32, #tpu.memory_space<vmem>>, vector<16x128xf32>
      %c0_10 = arith.constant 0 : index
      %c0_11 = arith.constant 0 : index
      %11 = vector.load %arg3[%c0_10, %c0_11] : memref<128x128xf32, #tpu.memory_space<vmem>>, vector<128x128xf32>
      %cst_12 = arith.constant dense<0.000000e+00> : vector<16x128xf32>
      %12 = tpu.matmul %10, %11, %cst_12 {dimension_numbers = #tpu.dot_dimension_numbers<[1], [0], [0], [1], [0, 0, 1, 1], [], []>} : vector<16x128xf32>, vector<128x128xf32>, vector<16x128xf32> -> vector<16x128xf32>
      %c0_13 = arith.constant 0 : index
      %c0_14 = arith.constant 0 : index
      %13 = vector.load %arg4[%c0_13, %c0_14] : memref<1x128xf32, #tpu.memory_space<vmem>>, vector<1x128xf32>
      %14 = vector.broadcast %13 : vector<1x128xf32> to vector<16x128xf32>
      %15 = arith.addf %12, %14 : vector<16x128xf32>
      %cst_15 = arith.constant 5.000000e-01 : f32
      %16 = vector.broadcast %cst_15 : f32 to vector<16x128xf32>
      %17 = arith.mulf %16, %15 : vector<16x128xf32>
      %cst_16 = arith.constant 0.707106769 : f32
      %18 = vector.broadcast %cst_16 : f32 to vector<16x128xf32>
      %19 = arith.mulf %15, %18 : vector<16x128xf32>
      %20 = math.erf %19 : vector<16x128xf32>
      %cst_17 = arith.constant 1.000000e+00 : f32
      %21 = vector.broadcast %cst_17 : f32 to vector<16x128xf32>
      %22 = arith.addf %21, %20 : vector<16x128xf32>
      %23 = arith.mulf %17, %22 : vector<16x128xf32>
      %cst_18 = arith.constant dense<0.000000e+00> : vector<16xf32>
      %24 = vector.multi_reduction <add>, %23, %cst_18 [1] : vector<16x128xf32> to vector<16xf32>
      %25 = vector.shape_cast %24 : vector<16xf32> to vector<16x1xf32>
      %cst_19 = arith.constant 1.280000e+02 : f32
      %26 = vector.broadcast %cst_19 : f32 to vector<16x1xf32>
      %27 = arith.divf %25, %26 : vector<16x1xf32>
      %28 = vector.broadcast %27 : vector<16x1xf32> to vector<16x128xf32>
      %29 = arith.subf %23, %28 : vector<16x128xf32>
      %30 = arith.mulf %29, %29 : vector<16x128xf32>
      %cst_20 = arith.constant dense<0.000000e+00> : vector<16xf32>
      %31 = vector.multi_reduction <add>, %30, %cst_20 [1] : vector<16x128xf32> to vector<16xf32>
      %32 = vector.shape_cast %31 : vector<16xf32> to vector<16x1xf32>
      %cst_21 = arith.constant 1.280000e+02 : f32
      %33 = vector.broadcast %cst_21 : f32 to vector<16x1xf32>
      %34 = arith.divf %32, %33 : vector<16x1xf32>
      %35 = vector.broadcast %27 : vector<16x1xf32> to vector<16x128xf32>
      %36 = arith.subf %23, %35 : vector<16x128xf32>
      %cst_22 = arith.constant 9.99999996E-13 : f32
      %37 = vector.broadcast %cst_22 : f32 to vector<16x1xf32>
      %38 = arith.addf %34, %37 : vector<16x1xf32>
      %39 = math.rsqrt %38 : vector<16x1xf32>
      %40 = vector.broadcast %39 : vector<16x1xf32> to vector<16x128xf32>
      %41 = arith.mulf %36, %40 : vector<16x128xf32>
      %c0_23 = arith.constant 0 : index
      %c0_24 = arith.constant 0 : index
      %42 = vector.load %arg5[%c0_23, %c0_24] : memref<1x128xf32, #tpu.memory_space<vmem>>, vector<1x128xf32>
      %43 = vector.broadcast %42 : vector<1x128xf32> to vector<16x128xf32>
      %44 = arith.mulf %41, %43 : vector<16x128xf32>
      %c0_25 = arith.constant 0 : index
      %c0_26 = arith.constant 0 : index
      %45 = vector.load %arg6[%c0_25, %c0_26] : memref<1x128xf32, #tpu.memory_space<vmem>>, vector<1x128xf32>
      %46 = vector.broadcast %45 : vector<1x128xf32> to vector<16x128xf32>
      %47 = arith.addf %44, %46 : vector<16x128xf32>
      %c0_27 = arith.constant 0 : index
      %c0_28 = arith.constant 0 : index
      %48 = vector.load %arg10[%c0_27, %c0_28] : memref<16x128xf32, #tpu.memory_space<vmem>>, vector<16x128xf32>
      tpu.vector_store %arg10[%c0_27, %c0_28], %47 {strides = array<i32>} : memref<16x128xf32, #tpu.memory_space<vmem>>, vector<16x128xf32>,
    } else {
    }
    %c0 = arith.constant 0 : index
    %c0_1 = arith.constant 0 : index
    %3 = vector.load %arg10[%c0, %c0_1] : memref<16x128xf32, #tpu.memory_space<vmem>>, vector<16x128xf32>
    %c0_2 = arith.constant 0 : index
    %c0_3 = arith.constant 0 : index
    %4 = vector.load %arg7[%c0_2, %c0_3] : memref<128x512xf32, #tpu.memory_space<vmem>>, vector<128x512xf32>
    %cst = arith.constant dense<0.000000e+00> : vector<16x512xf32>
    %5 = tpu.matmul %3, %4, %cst {dimension_numbers = #tpu.dot_dimension_numbers<[1], [0], [0], [1], [0, 0, 1, 1], [], []>} : vector<16x128xf32>, vector<128x512xf32>, vector<16x512xf32> -> vector<16x512xf32>
    %c0_4 = arith.constant 0 : index
    %c0_5 = arith.constant 0 : index
    %6 = vector.load %arg8[%c0_4, %c0_5] : memref<1x512xf32, #tpu.memory_space<vmem>>, vector<1x512xf32>
    %7 = vector.broadcast %6 : vector<1x512xf32> to vector<16x512xf32>
    %8 = arith.addf %5, %7 : vector<16x512xf32>
    %c0_6 = arith.constant 0 : index
    %c0_7 = arith.constant 0 : index
    %9 = vector.load %arg9[%c0_6, %c0_7] : memref<16x512xf32, #tpu.memory_space<vmem>>, vector<16x512xf32>
    tpu.vector_store %arg9[%c0_6, %c0_7], %8 {strides = array<i32>} : memref<16x512xf32, #tpu.memory_space<vmem>>, vector<16x512xf32>,
    return
  }
  func.func @transform_0(%arg0: i32, %arg1: i32) -> (i32, i32) {
    %c0_i32 = arith.constant 0 : i32
    %c0_i32_0 = arith.constant 0 : i32
    return %arg0, %c0_i32 : i32, i32
  }
  func.func @transform_1(%arg0: i32, %arg1: i32) -> (i32, i32) {
    %c0_i32 = arith.constant 0 : i32
    %c0_i32_0 = arith.constant 0 : i32
    %c0_i32_1 = arith.constant 0 : i32
    return %c0_i32, %c0_i32_0 : i32, i32
  }
  func.func @transform_2(%arg0: i32, %arg1: i32) -> (i32, i32) {
    %c0_i32 = arith.constant 0 : i32
    %c0_i32_0 = arith.constant 0 : i32
    %c0_i32_1 = arith.constant 0 : i32
    return %c0_i32, %c0_i32_0 : i32, i32
  }
  func.func @transform_3(%arg0: i32, %arg1: i32) -> (i32, i32) {
    %c0_i32 = arith.constant 0 : i32
    %c0_i32_0 = arith.constant 0 : i32
    %c0_i32_1 = arith.constant 0 : i32
    return %c0_i32, %c0_i32_0 : i32, i32
  }
  func.func @transform_4(%arg0: i32, %arg1: i32) -> (i32, i32) {
    %c0_i32 = arith.constant 0 : i32
    %c0_i32_0 = arith.constant 0 : i32
    %c0_i32_1 = arith.constant 0 : i32
    return %c0_i32, %c0_i32_0 : i32, i32
  }
  func.func @transform_5(%arg0: i32, %arg1: i32) -> (i32, i32) {
    %c0_i32 = arith.constant 0 : i32
    %c0_i32_0 = arith.constant 0 : i32
    return %c0_i32, %arg1 : i32, i32
  }
  func.func @transform_6(%arg0: i32, %arg1: i32) -> (i32, i32) {
    %c0_i32 = arith.constant 0 : i32
    %c0_i32_0 = arith.constant 0 : i32
    return %c0_i32, %arg1 : i32, i32
  }
  func.func @transform_7(%arg0: i32, %arg1: i32) -> (i32, i32) {
    %c0_i32 = arith.constant 0 : i32
    return %arg0, %arg1 : i32, i32
  }
}

</mosaic_0001>

<llo_original>
// kernel: prediction_head.1
$region0: #{prediction_head.1}
  #allocation0 [shape = 'u32[]', space=smem, size = 0x4, offset = 0x4, fixed_abs, tag = 'smem constant byte address 0x4 - core index']
  #allocation1 [shape = 'u32[144,128]{1,0:T(1,128)}', space=vmem, size = 0x12000, scoped, tag = 'internal scratch']
  #allocation2 [shape = 'f32[16,128]{1,0:T(8,128)}', space=vmem, size = 0x2000, scoped, tag = 'scratch operand']
  %s0 = inlined_call_operand.hbm [shape: f32[16,128], index: 0, kind: input, shape index: {}]
  %s1 = inlined_call_operand.hbm [shape: f32[128,128], index: 1, kind: input, shape index: {}]
  %s2 = inlined_call_operand.vmem [shape: f32[1,128], index: 2, kind: input, shape index: {}]
  %s3 = inlined_call_operand.vmem [shape: f32[1,128], index: 3, kind: input, shape index: {}]
  %s4 = inlined_call_operand.vmem [shape: f32[1,128], index: 4, kind: input, shape index: {}]
  %s5 = inlined_call_operand.hbm [shape: f32[128,512], index: 5, kind: input, shape index: {}]
  %s6 = inlined_call_operand.vmem [shape: f32[1,512], index: 6, kind: input, shape index: {}]
  %s7 = inlined_call_operand.hbm [shape: f32[16,512], index: 7, kind: output, shape index: {}]
  %s8 = sld [smem:[#allocation0]]
  $region54: #{prediction_head.1} parent=0
    _
  %s10 = ssub.s32 1, %s8
  %s11 = scalar_select 0, %s10, %s8
  $region1: #{prediction_head.1} parent=0
    #allocation3 [shape = 'u8[8192]{0}', space=vmem, size = 0x2000, scoped, tag = 'input window, operand 0, single buffered']
    #allocation4 [shape = 's32[1]{0}', space=sflag, size = 0x4, scoped, tag = 'scoped memory for prediction_head.1']
    #allocation5 [shape = 's32[1]{0}', space=sflag, size = 0x4, scoped, tag = 'scoped memory for prediction_head.1']
    #allocation6 [shape = 'u8[65536]{0}', space=vmem, size = 0x10000, scoped, tag = 'input window, operand 1, single buffered']
    #allocation7 [shape = 's32[1]{0}', space=sflag, size = 0x4, scoped, tag = 'scoped memory for prediction_head.1']
    #allocation8 [shape = 'u8[262144]{0}', space=vmem, size = 0x40000, scoped, tag = 'input window, operand 5, single buffered']
    #allocation9 [shape = 'u8[32768]{0}', space=vmem, size = 0x8000, scoped, tag = 'output window, operand 0, single buffered']
    %12 = vsyncpa [#allocation4], 0
    %13 = vsyncpa [#allocation7], 0
    %14 = vsyncpa [#allocation5], 0
    // Predicated region
    $region2: #{prediction_head.1} parent=1 // pred_check
      _
    $region3: #{prediction_head.1} parent=1 // pred_check_branch
      %16 = sbr.rel (0) target = $region5
    $region4: #{prediction_head.1} parent=1 // pred_region
      %s18 = ssub.s32 256, 256
      %19 = vsyncadd [#allocation4], %s18
      %s20 = sshll.u32 [#allocation3], 4
      %s21 = int_to_ptr.vmem [resolvable:$true] %s20
      %26 = dma.hbm_to_vmem [thread:$0]  %s0, 256, %s21, [#allocation4], 128, 128, 8
    $region5: #{prediction_head.1} parent=1 // pred_fallthru
      _
    // Predicated region
    $region6: #{prediction_head.1} parent=1 // pred_check
      _
    $region7: #{prediction_head.1} parent=1 // pred_check_branch
      %28 = sbr.rel (0) target = $region9
    $region8: #{prediction_head.1} parent=1 // pred_region
      %s30 = ssub.s32 2048, 2048
      %31 = vsyncadd [#allocation7], %s30
      %s32 = sshll.u32 [#allocation6], 4
      %s33 = int_to_ptr.vmem [resolvable:$true] %s32
      %38 = dma.hbm_to_vmem [thread:$0]  %s1, 2048, %s33, [#allocation7], 128, 128, 8
    $region9: #{prediction_head.1} parent=1 // pred_fallthru
      _
    // Predicated region
    $region10: #{prediction_head.1} parent=1 // pred_check
      _
    $region11: #{prediction_head.1} parent=1 // pred_check_branch
      %40 = sbr.rel (0) target = $region13
    $region12: #{prediction_head.1} parent=1 // pred_region
      _
    $region13: #{prediction_head.1} parent=1 // pred_fallthru
      _
    // Predicated region
    $region14: #{prediction_head.1} parent=1 // pred_check
      _
    $region15: #{prediction_head.1} parent=1 // pred_check_branch
      %42 = sbr.rel (0) target = $region17
    $region16: #{prediction_head.1} parent=1 // pred_region
      _
    $region17: #{prediction_head.1} parent=1 // pred_fallthru
      _
    // Predicated region
    $region18: #{prediction_head.1} parent=1 // pred_check
      _
    $region19: #{prediction_head.1} parent=1 // pred_check_branch
      %44 = sbr.rel (0) target = $region21
    $region20: #{prediction_head.1} parent=1 // pred_region
      _
    $region21: #{prediction_head.1} parent=1 // pred_fallthru
      _
    // Predicated region
    $region22: #{prediction_head.1} parent=1 // pred_check
      _
    $region23: #{prediction_head.1} parent=1 // pred_check_branch
      %46 = sbr.rel (0) target = $region25
    $region24: #{prediction_head.1} parent=1 // pred_region
      %s48 = ssub.s32 8192, 8192
      %49 = vsyncadd [#allocation7], %s48
      %s50 = sshll.u32 [#allocation8], 4
      %s51 = int_to_ptr.vmem [resolvable:$true] %s50
      %56 = dma.hbm_to_vmem [thread:$0]  %s5, 8192, %s51, [#allocation7], 512, 512, 32
    $region25: #{prediction_head.1} parent=1 // pred_fallthru
      _
    // Predicated region
    $region26: #{prediction_head.1} parent=1 // pred_check
      _
    $region27: #{prediction_head.1} parent=1 // pred_check_branch
      %58 = sbr.rel (0) target = $region29
    $region28: #{prediction_head.1} parent=1 // pred_region
      _
    $region29: #{prediction_head.1} parent=1 // pred_fallthru
      _
    // Predicated region
    $region30: #{prediction_head.1} parent=1 // pred_check
      _
    $region31: #{prediction_head.1} parent=1 // pred_check_branch
      %60 = sbr.rel (0) target = $region33
    $region32: #{prediction_head.1} parent=1 // pred_region
      %61 = dma.done [#allocation4], 256
    $region33: #{prediction_head.1} parent=1 // pred_fallthru
      _
    // Predicated region
    $region34: #{prediction_head.1} parent=1 // pred_check
      _
    $region35: #{prediction_head.1} parent=1 // pred_check_branch
      %63 = sbr.rel (0) target = $region37
    $region36: #{prediction_head.1} parent=1 // pred_region
      %64 = dma.done [#allocation7], 2048
    $region37: #{prediction_head.1} parent=1 // pred_fallthru
      _
    // Predicated region
    $region38: #{prediction_head.1} parent=1 // pred_check
      _
    $region39: #{prediction_head.1} parent=1 // pred_check_branch
      %66 = sbr.rel (0) target = $region41
    $region40: #{prediction_head.1} parent=1 // pred_region
      %67 = dma.done [#allocation7], 8192
    $region41: #{prediction_head.1} parent=1 // pred_fallthru
      _
    %p68 = scmp.eq.s32.totalorder 0, 0
    // Predicated region
    $region42: #{prediction_head.1} parent=1 // pred_check
      %p69 = pneg %p68
    $region43: #{prediction_head.1} parent=1 // pred_check_branch
      %71 = sbr.rel (%p69) target = $region45
    $region44: #{prediction_head.1} parent=1 // pred_region
      %v72 = vld [vmem:[#allocation3] sm:$0xff]
      %v73 = vld [vmem:[#allocation3 + $0x8] sm:$0xff]
      %v74 = vld [vmem:[#allocation6] sm:$0xff]
      %v75 = vld [vmem:[#allocation6 + $0x8] sm:$0xff]
      %v76 = vld [vmem:[#allocation6 + $0x10] sm:$0xff]
      %v77 = vld [vmem:[#allocation6 + $0x18] sm:$0xff]
      %v78 = vld [vmem:[#allocation6 + $0x20] sm:$0xff]
      %v79 = vld [vmem:[#allocation6 + $0x28] sm:$0xff]
      %v80 = vld [vmem:[#allocation6 + $0x30] sm:$0xff]
      %v81 = vld [vmem:[#allocation6 + $0x38] sm:$0xff]
      %v82 = vld [vmem:[#allocation6 + $0x40] sm:$0xff]
      %v83 = vld [vmem:[#allocation6 + $0x48] sm:$0xff]
      %v84 = vld [vmem:[#allocation6 + $0x50] sm:$0xff]
      %v85 = vld [vmem:[#allocation6 + $0x58] sm:$0xff]
      %v86 = vld [vmem:[#allocation6 + $0x60] sm:$0xff]
      %v87 = vld [vmem:[#allocation6 + $0x68] sm:$0xff]
      %v88 = vld [vmem:[#allocation6 + $0x70] sm:$0xff]
      %v89 = vld [vmem:[#allocation6 + $0x78] sm:$0xff]
      %v90 = vld [vmem:[%s2] sm:$0x1]
      %v92 = vlaneseq
      %v93 = vshrl.u32 %v92, 7
      %v94 = vsub.s32 0, %v93
      %v95 = vrot.slane %v90, %v94
      %97 = vmatprep.subr.mxu0 0.0
      %98 = vmatpush1.msra.mxu0 %v89
      %99 = vmatprep.subr.mxu0 0.0
      %100 = vmatpush1.msra.mxu0 %v88
      %101 = vmatprep.subr.mxu0 0.0
      %102 = vmatpush1.msra.mxu0 %v87
      %103 = vmatprep.subr.mxu0 0.0
      %104 = vmatpush1.msra.mxu0 %v86
      %105 = vmatprep.subr.mxu0 0.0
      %106 = vmatpush1.msra.mxu0 %v85
      %107 = vmatprep.subr.mxu0 0.0
      %108 = vmatpush1.msra.mxu0 %v84
      %109 = vmatprep.subr.mxu0 0.0
      %110 = vmatpush1.msra.mxu0 %v83
      %111 = vmatprep.subr.mxu0 0.0
      %112 = vmatpush1.msra.mxu0 %v82
      %113 = vmatprep.subr.mxu0 0.0
      %114 = vmatpush1.msra.mxu0 %v81
      %115 = vmatprep.subr.mxu0 0.0
      %116 = vmatpush1.msra.mxu0 %v80
      %117 = vmatprep.subr.mxu0 0.0
      %118 = vmatpush1.msra.mxu0 %v79
      %119 = vmatprep.subr.mxu0 0.0
      %120 = vmatpush1.msra.mxu0 %v78
      %121 = vmatprep.subr.mxu0 0.0
      %122 = vmatpush1.msra.mxu0 %v77
      %123 = vmatprep.subr.mxu0 0.0
      %124 = vmatpush1.msra.mxu0 %v76
      %125 = vmatprep.subr.mxu0 0.0
      %126 = vmatpush1.msra.mxu0 %v75
      %127 = vmatprep.subr.mxu0 0.0
      %128 = vmatpush1.msra.mxu0 %v74
      %129 = vmatprep.subr.mxu0 0.0
      %130 = vmatpush2.msra.mxu0 0.0
      %131 = vmatprep.subr.mxu0 0.0
      %132 = vmatpush2.msra.mxu0 0.0
      %133 = vmatprep.subr.mxu0 0.0
      %134 = vmatpush2.msra.mxu0 0.0
      %135 = vmatprep.subr.mxu0 0.0
      %136 = vmatpush2.msra.mxu0 0.0
      %137 = vmatprep.subr.mxu0 0.0
      %138 = vmatpush2.msra.mxu0 0.0
      %139 = vmatprep.subr.mxu0 0.0
      %140 = vmatpush2.msra.mxu0 0.0
      %141 = vmatprep.subr.mxu0 0.0
      %142 = vmatpush2.msra.mxu0 0.0
      %143 = vmatprep.subr.mxu0 0.0
      %144 = vmatpush2.msra.mxu0 0.0
      %145 = vmatprep.subr.mxu0 0.0
      %146 = vmatpush2.msra.mxu0 0.0
      %147 = vmatprep.subr.mxu0 0.0
      %148 = vmatpush2.msra.mxu0 0.0
      %149 = vmatprep.subr.mxu0 0.0
      %150 = vmatpush2.msra.mxu0 0.0
      %151 = vmatprep.subr.mxu0 0.0
      %152 = vmatpush2.msra.mxu0 0.0
      %153 = vmatprep.subr.mxu0 0.0
      %154 = vmatpush2.msra.mxu0 0.0
      %155 = vmatprep.subr.mxu0 0.0
      %156 = vmatpush2.msra.mxu0 0.0
      %157 = vmatprep.subr.mxu0 0.0
      %158 = vmatpush2.msra.mxu0 0.0
      %159 = vmatprep.subr.mxu0 0.0
      %160 = vmatpush2.msra.mxu0 0.0
      %161 = vmatprep.mubr.f32.mxu0 0.0
      %162 = vmatmul.mubr.f32.gmra.mxu0 %v72
      %v163 = vpop.f32.mrf.mxu0
      %v164 = vadd.f32 %v95, %v163
      %v165 = vpop.f32.mrf.mxu0
      %166 = vmatprep.mubr.f32.mxu0 0.0
      %167 = vmatmul.mubr.f32.gmra.mxu0 %v73
      %v168 = vpop.f32.mrf.mxu0
      %v169 = vadd.f32 %v95, %v168
      %v170 = vpop.f32.mrf.mxu0
      %171 = vdwg.mxu0
      %v172 = vmul.f32 %v164, 0.5
      %v173 = vmul.f32 %v169, 0.5
      %v174 = vmul.f32 %v164, 0.70710677
      %v175 = vmul.f32 %v169, 0.70710677
      %v176 = verf.f32.pop %v174
      %v177 = verf.f32.pop %v175
      %v178 = vadd.f32 %v176, 1.0
      %v179 = vadd.f32 %v177, 1.0
      %v180 = vmul.f32 %v172, %v178
      %v181 = vmul.f32 %v173, %v179
      %182 = vadd.xlane.f32.xlu0 %v180
      %v183 = vpop.xlane.xlu0 %182
      %184 = vadd.xlane.f32.xlu0 %v181
      %v185 = vpop.xlane.xlu0 %184
      %v186 = vrcp.pop 128.0
      %v187 = vmul.f32 %v183, %v186
      %v188 = vmul.f32 %v185, %v186
      %v189 = vsub.f32 %v180, %v187
      %v190 = vsub.f32 %v181, %v188
      %v191 = vmul.f32 %v189, %v189
      %v192 = vmul.f32 %v190, %v190
      %193 = vadd.xlane.f32.xlu0 %v191
      %v194 = vpop.xlane.xlu0 %193
      %195 = vadd.xlane.f32.xlu0 %v192
      %v196 = vpop.xlane.xlu0 %195
      %v197 = vmul.f32 %v194, %v186
      %v198 = vmul.f32 %v196, %v186
      %v199 = vadd.f32 %v197, 1e-12
      %v200 = vadd.f32 %v198, 1e-12
      %v201 = vrsqrt.pop %v199
      %v202 = vrsqrt.pop %v200
      %v203 = vmul.f32 %v189, %v201
      %v204 = vmul.f32 %v190, %v202
      %v205 = vld [vmem:[%s3] sm:$0x1]
      %v207 = vlaneseq
      %v208 = vshrl.u32 %v207, 7
      %v209 = vsub.s32 0, %v208
      %v210 = vrot.slane %v205, %v209
      %v212 = vmul.f32 %v203, %v210
      %v213 = vmul.f32 %v204, %v210
      %v214 = vld [vmem:[%s4] sm:$0x1]
      %v216 = vlaneseq
      %v217 = vshrl.u32 %v216, 7
      %v218 = vsub.s32 0, %v217
      %v219 = vrot.slane %v214, %v218
      %v221 = vadd.f32 %v212, %v219
      %v222 = vadd.f32 %v213, %v219
      %223 = vst [vmem:[#allocation2] sm:$0xff] %v221
      %224 = vst [vmem:[#allocation2 + $0x8] sm:$0xff] %v222
    $region45: #{prediction_head.1} parent=1 // pred_fallthru
      _
    %v225 = vld [vmem:[#allocation2] sm:$0xff]
    %v226 = vld [vmem:[#allocation2 + $0x8] sm:$0xff]
    %v227 = vld [vmem:[#allocation8] sm:$0xff]
    %v228 = vld [vmem:[#allocation8 + $0x8] sm:$0xff]
    %v229 = vld [vmem:[#allocation8 + $0x10] sm:$0xff]
    %v230 = vld [vmem:[#allocation8 + $0x18] sm:$0xff]
    %v231 = vld [vmem:[#allocation8 + $0x20] sm:$0xff]
    %v232 = vld [vmem:[#allocation8 + $0x28] sm:$0xff]
    %v233 = vld [vmem:[#allocation8 + $0x30] sm:$0xff]
    %v234 = vld [vmem:[#allocation8 + $0x38] sm:$0xff]
    %v235 = vld [vmem:[#allocation8 + $0x40] sm:$0xff]
    %v236 = vld [vmem:[#allocation8 + $0x48] sm:$0xff]
    %v237 = vld [vmem:[#allocation8 + $0x50] sm:$0xff]
    %v238 = vld [vmem:[#allocation8 + $0x58] sm:$0xff]
    %v239 = vld [vmem:[#allocation8 + $0x60] sm:$0xff]
    %v240 = vld [vmem:[#allocation8 + $0x68] sm:$0xff]
    %v241 = vld [vmem:[#allocation8 + $0x70] sm:$0xff]
    %v242 = vld [vmem:[#allocation8 + $0x78] sm:$0xff]
    %v243 = vld [vmem:[#allocation8 + $0x80] sm:$0xff]
    %v244 = vld [vmem:[#allocation8 + $0x88] sm:$0xff]
    %v245 = vld [vmem:[#allocation8 + $0x90] sm:$0xff]
    %v246 = vld [vmem:[#allocation8 + $0x98] sm:$0xff]
    %v247 = vld [vmem:[#allocation8 + $0xa0] sm:$0xff]
    %v248 = vld [vmem:[#allocation8 + $0xa8] sm:$0xff]
    %v249 = vld [vmem:[#allocation8 + $0xb0] sm:$0xff]
    %v250 = vld [vmem:[#allocation8 + $0xb8] sm:$0xff]
    %v251 = vld [vmem:[#allocation8 + $0xc0] sm:$0xff]
    %v252 = vld [vmem:[#allocation8 + $0xc8] sm:$0xff]
    %v253 = vld [vmem:[#allocation8 + $0xd0] sm:$0xff]
    %v254 = vld [vmem:[#allocation8 + $0xd8] sm:$0xff]
    %v255 = vld [vmem:[#allocation8 + $0xe0] sm:$0xff]
    %v256 = vld [vmem:[#allocation8 + $0xe8] sm:$0xff]
    %v257 = vld [vmem:[#allocation8 + $0xf0] sm:$0xff]
    %v258 = vld [vmem:[#allocation8 + $0xf8] sm:$0xff]
    %v259 = vld [vmem:[#allocation8 + $0x100] sm:$0xff]
    %v260 = vld [vmem:[#allocation8 + $0x108] sm:$0xff]
    %v261 = vld [vmem:[#allocation8 + $0x110] sm:$0xff]
    %v262 = vld [vmem:[#allocation8 + $0x118] sm:$0xff]
    %v263 = vld [vmem:[#allocation8 + $0x120] sm:$0xff]
    %v264 = vld [vmem:[#allocation8 + $0x128] sm:$0xff]
    %v265 = vld [vmem:[#allocation8 + $0x130] sm:$0xff]
    %v266 = vld [vmem:[#allocation8 + $0x138] sm:$0xff]
    %v267 = vld [vmem:[#allocation8 + $0x140] sm:$0xff]
    %v268 = vld [vmem:[#allocation8 + $0x148] sm:$0xff]
    %v269 = vld [vmem:[#allocation8 + $0x150] sm:$0xff]
    %v270 = vld [vmem:[#allocation8 + $0x158] sm:$0xff]
    %v271 = vld [vmem:[#allocation8 + $0x160] sm:$0xff]
    %v272 = vld [vmem:[#allocation8 + $0x168] sm:$0xff]
    %v273 = vld [vmem:[#allocation8 + $0x170] sm:$0xff]
    %v274 = vld [vmem:[#allocation8 + $0x178] sm:$0xff]
    %v275 = vld [vmem:[#allocation8 + $0x180] sm:$0xff]
    %v276 = vld [vmem:[#allocation8 + $0x188] sm:$0xff]
    %v277 = vld [vmem:[#allocation8 + $0x190] sm:$0xff]
    %v278 = vld [vmem:[#allocation8 + $0x198] sm:$0xff]
    %v279 = vld [vmem:[#allocation8 + $0x1a0] sm:$0xff]
    %v280 = vld [vmem:[#allocation8 + $0x1a8] sm:$0xff]
    %v281 = vld [vmem:[#allocation8 + $0x1b0] sm:$0xff]
    %v282 = vld [vmem:[#allocation8 + $0x1b8] sm:$0xff]
    %v283 = vld [vmem:[#allocation8 + $0x1c0] sm:$0xff]
    %v284 = vld [vmem:[#allocation8 + $0x1c8] sm:$0xff]
    %v285 = vld [vmem:[#allocation8 + $0x1d0] sm:$0xff]
    %v286 = vld [vmem:[#allocation8 + $0x1d8] sm:$0xff]
    %v287 = vld [vmem:[#allocation8 + $0x1e0] sm:$0xff]
    %v288 = vld [vmem:[#allocation8 + $0x1e8] sm:$0xff]
    %v289 = vld [vmem:[#allocation8 + $0x1f0] sm:$0xff]
    %v290 = vld [vmem:[#allocation8 + $0x1f8] sm:$0xff]
    %v291 = vld [vmem:[%s6] sm:$0xf]
    %v293 = vlaneseq
    %v294 = vshrl.u32 %v293, 7
    %v295 = vsub.s32 0, %v294
    %v296 = vrot.slane %v291, %v295
    %v297 = vlaneseq
    %v298 = vshrl.u32 %v297, 7
    %v299 = vsub.s32 1, %v298
    %v300 = vrot.slane %v291, %v299
    %v301 = vlaneseq
    %v302 = vshrl.u32 %v301, 7
    %v303 = vsub.s32 2, %v302
    %v304 = vrot.slane %v291, %v303
    %v305 = vlaneseq
    %v306 = vshrl.u32 %v305, 7
    %v307 = vsub.s32 3, %v306
    %v308 = vrot.slane %v291, %v307
    %313 = vmatprep.subr.mxu0 %v288
    %314 = vmatpush1.msra.mxu0 %v287
    %315 = vmatprep.subr.mxu0 %v284
    %316 = vmatpush1.msra.mxu0 %v283
    %317 = vmatprep.subr.mxu0 %v280
    %318 = vmatpush1.msra.mxu0 %v279
    %319 = vmatprep.subr.mxu0 %v276
    %320 = vmatpush1.msra.mxu0 %v275
    %321 = vmatprep.subr.mxu0 %v272
    %322 = vmatpush1.msra.mxu0 %v271
    %323 = vmatprep.subr.mxu0 %v268
    %324 = vmatpush1.msra.mxu0 %v267
    %325 = vmatprep.subr.mxu0 %v264
    %326 = vmatpush1.msra.mxu0 %v263
    %327 = vmatprep.subr.mxu0 %v260
    %328 = vmatpush1.msra.mxu0 %v259
    %329 = vmatprep.subr.mxu0 %v256
    %330 = vmatpush1.msra.mxu0 %v255
    %331 = vmatprep.subr.mxu0 %v252
    %332 = vmatpush1.msra.mxu0 %v251
    %333 = vmatprep.subr.mxu0 %v248
    %334 = vmatpush1.msra.mxu0 %v247
    %335 = vmatprep.subr.mxu0 %v244
    %336 = vmatpush1.msra.mxu0 %v243
    %337 = vmatprep.subr.mxu0 %v240
    %338 = vmatpush1.msra.mxu0 %v239
    %339 = vmatprep.subr.mxu0 %v236
    %340 = vmatpush1.msra.mxu0 %v235
    %341 = vmatprep.subr.mxu0 %v232
    %342 = vmatpush1.msra.mxu0 %v231
    %343 = vmatprep.subr.mxu0 %v228
    %344 = vmatpush1.msra.mxu0 %v227
    %345 = vmatprep.subr.mxu0 0.0
    %346 = vmatpush2.msra.mxu0 0.0
    %347 = vmatprep.subr.mxu0 0.0
    %348 = vmatpush2.msra.mxu0 0.0
    %349 = vmatprep.subr.mxu0 0.0
    %350 = vmatpush2.msra.mxu0 0.0
    %351 = vmatprep.subr.mxu0 0.0
    %352 = vmatpush2.msra.mxu0 0.0
    %353 = vmatprep.subr.mxu0 0.0
    %354 = vmatpush2.msra.mxu0 0.0
    %355 = vmatprep.subr.mxu0 0.0
    %356 = vmatpush2.msra.mxu0 0.0
    %357 = vmatprep.subr.mxu0 0.0
    %358 = vmatpush2.msra.mxu0 0.0
    %359 = vmatprep.subr.mxu0 0.0
    %360 = vmatpush2.msra.mxu0 0.0
    %361 = vmatprep.subr.mxu0 0.0
    %362 = vmatpush2.msra.mxu0 0.0
    %363 = vmatprep.subr.mxu0 0.0
    %364 = vmatpush2.msra.mxu0 0.0
    %365 = vmatprep.subr.mxu0 0.0
    %366 = vmatpush2.msra.mxu0 0.0
    %367 = vmatprep.subr.mxu0 0.0
    %368 = vmatpush2.msra.mxu0 0.0
    %369 = vmatprep.subr.mxu0 0.0
    %370 = vmatpush2.msra.mxu0 0.0
    %371 = vmatprep.subr.mxu0 0.0
    %372 = vmatpush2.msra.mxu0 0.0
    %373 = vmatprep.subr.mxu0 0.0
    %374 = vmatpush2.msra.mxu0 0.0
    %375 = vmatprep.subr.mxu0 0.0
    %376 = vmatpush2.msra.mxu0 0.0
    %377 = vmatprep.mubr.f32.mxu0 0.0
    %378 = vmatmul.mubr.f32.gmra.mxu0 %v225
    %v379 = vpop.f32.mrf.mxu0
    %v380 = vadd.f32 %v296, %v379
    %v381 = vpop.f32.mrf.mxu0
    %v382 = vadd.f32 %v300, %v381
    %383 = vmatprep.mubr.f32.mxu0 0.0
    %384 = vmatmul.mubr.f32.gmra.mxu0 %v226
    %v385 = vpop.f32.mrf.mxu0
    %v386 = vadd.f32 %v296, %v385
    %v387 = vpop.f32.mrf.mxu0
    %v388 = vadd.f32 %v300, %v387
    %389 = vdwg.mxu0
    %390 = vmatprep.subr.mxu0 %v290
    %391 = vmatpush1.msra.mxu0 %v289
    %392 = vmatprep.subr.mxu0 %v286
    %393 = vmatpush1.msra.mxu0 %v285
    %394 = vmatprep.subr.mxu0 %v282
    %395 = vmatpush1.msra.mxu0 %v281
    %396 = vmatprep.subr.mxu0 %v278
    %397 = vmatpush1.msra.mxu0 %v277
    %398 = vmatprep.subr.mxu0 %v274
    %399 = vmatpush1.msra.mxu0 %v273
    %400 = vmatprep.subr.mxu0 %v270
    %401 = vmatpush1.msra.mxu0 %v269
    %402 = vmatprep.subr.mxu0 %v266
    %403 = vmatpush1.msra.mxu0 %v265
    %404 = vmatprep.subr.mxu0 %v262
    %405 = vmatpush1.msra.mxu0 %v261
    %406 = vmatprep.subr.mxu0 %v258
    %407 = vmatpush1.msra.mxu0 %v257
    %408 = vmatprep.subr.mxu0 %v254
    %409 = vmatpush1.msra.mxu0 %v253
    %410 = vmatprep.subr.mxu0 %v250
    %411 = vmatpush1.msra.mxu0 %v249
    %412 = vmatprep.subr.mxu0 %v246
    %413 = vmatpush1.msra.mxu0 %v245
    %414 = vmatprep.subr.mxu0 %v242
    %415 = vmatpush1.msra.mxu0 %v241
    %416 = vmatprep.subr.mxu0 %v238
    %417 = vmatpush1.msra.mxu0 %v237
    %418 = vmatprep.subr.mxu0 %v234
    %419 = vmatpush1.msra.mxu0 %v233
    %420 = vmatprep.subr.mxu0 %v230
    %421 = vmatpush1.msra.mxu0 %v229
    %422 = vmatprep.subr.mxu0 0.0
    %423 = vmatpush2.msra.mxu0 0.0
    %424 = vmatprep.subr.mxu0 0.0
    %425 = vmatpush2.msra.mxu0 0.0
    %426 = vmatprep.subr.mxu0 0.0
    %427 = vmatpush2.msra.mxu0 0.0
    %428 = vmatprep.subr.mxu0 0.0
    %429 = vmatpush2.msra.mxu0 0.0
    %430 = vmatprep.subr.mxu0 0.0
    %431 = vmatpush2.msra.mxu0 0.0
    %432 = vmatprep.subr.mxu0 0.0
    %433 = vmatpush2.msra.mxu0 0.0
    %434 = vmatprep.subr.mxu0 0.0
    %435 = vmatpush2.msra.mxu0 0.0
    %436 = vmatprep.subr.mxu0 0.0
    %437 = vmatpush2.msra.mxu0 0.0
    %438 = vmatprep.subr.mxu0 0.0
    %439 = vmatpush2.msra.mxu0 0.0
    %440 = vmatprep.subr.mxu0 0.0
    %441 = vmatpush2.msra.mxu0 0.0
    %442 = vmatprep.subr.mxu0 0.0
    %443 = vmatpush2.msra.mxu0 0.0
    %444 = vmatprep.subr.mxu0 0.0
    %445 = vmatpush2.msra.mxu0 0.0
    %446 = vmatprep.subr.mxu0 0.0
    %447 = vmatpush2.msra.mxu0 0.0
    %448 = vmatprep.subr.mxu0 0.0
    %449 = vmatpush2.msra.mxu0 0.0
    %450 = vmatprep.subr.mxu0 0.0
    %451 = vmatpush2.msra.mxu0 0.0
    %452 = vmatprep.subr.mxu0 0.0
    %453 = vmatpush2.msra.mxu0 0.0
    %454 = vmatprep.mubr.f32.mxu0 0.0
    %455 = vmatmul.mubr.f32.gmra.mxu0 %v225
    %v456 = vpop.f32.mrf.mxu0
    %v457 = vadd.f32 %v304, %v456
    %v458 = vpop.f32.mrf.mxu0
    %v459 = vadd.f32 %v308, %v458
    %460 = vmatprep.mubr.f32.mxu0 0.0
    %461 = vmatmul.mubr.f32.gmra.mxu0 %v226
    %v462 = vpop.f32.mrf.mxu0
    %v463 = vadd.f32 %v304, %v462
    %v464 = vpop.f32.mrf.mxu0
    %v465 = vadd.f32 %v308, %v464
    %466 = vdwg.mxu0
    %467 = vst [vmem:[#allocation9] sm:$0xff] %v380
    %468 = vst [vmem:[#allocation9 + $0x8] sm:$0xff] %v382
    %469 = vst [vmem:[#allocation9 + $0x10] sm:$0xff] %v457
    %470 = vst [vmem:[#allocation9 + $0x18] sm:$0xff] %v459
    %471 = vst [vmem:[#allocation9 + $0x20] sm:$0xff] %v386
    %472 = vst [vmem:[#allocation9 + $0x28] sm:$0xff] %v388
    %473 = vst [vmem:[#allocation9 + $0x30] sm:$0xff] %v463
    %474 = vst [vmem:[#allocation9 + $0x38] sm:$0xff] %v465
    // Predicated region
    $region46: #{prediction_head.1} parent=1 // pred_check
      _
    $region47: #{prediction_head.1} parent=1 // pred_check_branch
      %476 = sbr.rel (0) target = $region49
    $region48: #{prediction_head.1} parent=1 // pred_region
      %s478 = ssub.s32 1024, 1024
      %479 = vsyncadd [#allocation5], %s478
      %s480 = sshll.u32 [#allocation9], 4
      %s481 = int_to_ptr.vmem [resolvable:$true] %s480
      %486 = dma.vmem_to_hbm [thread:$0]  %s481, 1024, %s7, [#allocation5], 512, 512, 32
    $region49: #{prediction_head.1} parent=1 // pred_fallthru
      _
    // Predicated region
    $region50: #{prediction_head.1} parent=1 // pred_check
      _
    $region51: #{prediction_head.1} parent=1 // pred_check_branch
      %488 = sbr.rel (0) target = $region53
    $region52: #{prediction_head.1} parent=1 // pred_region
      %489 = dma.done [#allocation5], 1024
    $region53: #{prediction_head.1} parent=1 // pred_fallthru
      _
    %490 = vsyncpa [#allocation4], 1
    %491 = vsyncpa [#allocation7], 1
    %492 = vsyncpa [#allocation5], 1

</llo_original>
